<compile_context>
chip_gen: v7x
topology: tpu7x:2x2x1
jax: 0.10.0
libtpu: 0.0.40
codegen_flags: <defaults>
</compile_context>

<pallas_src>
import math

import jax
import jax.numpy as jnp
from jax.experimental import pallas as pl
from jax.experimental.pallas import tpu as pltpu

_LANE = 128
_TARGET_TILE_BYTES = 4 << 20      # ~4 MiB per block (roofline plateau on v6e).
_VMEM_LIMIT_BYTES = 32 << 20      # 4 buffers x 4 MiB = 16 MiB; safe on v5e/v6e/v7x.


def _copy_kernel(x_ref, o_ref):
    # Pure-bandwidth op: one full-tile, lane-aligned store per grid step.
    o_ref[...] = x_ref[...]


def _sublane_granule(dtype):
    # Packed-sublane granule: f32 -> 8, bf16 -> 16, int8/fp8 -> 32.
    itemsize = jnp.dtype(dtype).itemsize
    return max(8, 32 // max(itemsize, 1))


def _pallas_flat_copy(flat, lane_width=None, row_tile=None):
    """Identity copy of a 1-D, 128-aligned array through a tiled Pallas kernel."""
    n = flat.shape[0]
    assert n % _LANE == 0, "ragged sizes are handled by the caller"

    # Lane-dense width: prefer wide tiles (fewer, wider stores amortize the
    # ~0.35 us per-grid-step overhead, esp. on v5e's single vst slot).
    if lane_width is None:
        lane_width = _LANE
        for cand in (2048, 1024, 512, 256):
            if n % cand == 0:
                lane_width = cand
                break
    assert lane_width % _LANE == 0 and n % lane_width == 0

    rows = n // lane_width
    itemsize = jnp.dtype(flat.dtype).itemsize
    granule = _sublane_granule(flat.dtype)

    if row_tile is None:
        # Scale the tile inversely with lane width so narrow-lane fallbacks
        # still get ~4 MiB blocks instead of 128 KiB ones.
        row_tile = max(granule, _TARGET_TILE_BYTES // (lane_width * itemsize))
    # Keep the grid at >= 4 steps when possible: a 1-step grid serializes
    # load -> copy -> store (no DMA overlap) and idles one v7x TensorCore.
    if rows >= 4 * granule:
        row_tile = min(row_tile, rows // 4)
    row_tile = max(granule, (row_tile // granule) * granule)
    row_tile = min(row_tile, rows)

    x2d = flat.reshape(rows, lane_width)
    nbytes = x2d.size * itemsize

    out2d = pl.pallas_call(
        _copy_kernel,
        out_shape=jax.ShapeDtypeStruct((rows, lane_width), x2d.dtype),
        grid=(pl.cdiv(rows, row_tile),),
        in_specs=[pl.BlockSpec((row_tile, lane_width), lambda i: (i, 0))],
        out_specs=pl.BlockSpec((row_tile, lane_width), lambda i: (i, 0)),
        compiler_params=pltpu.CompilerParams(
            dimension_semantics=("parallel",),       # megacore sharding on v7x
            vmem_limit_bytes=_VMEM_LIMIT_BYTES),
        cost_estimate=pl.CostEstimate(
            flops=0, transcendentals=0, bytes_accessed=2 * nbytes),
    )(x2d)

    return out2d.reshape(n)


def reshape_forward(x, shape, *, force_copy=False, lane_width=None, row_tile=None):
    """Pallas equivalent of `x.reshape([-1] + list(shape))`.

    Reshape is metadata-only, so by default no kernel is launched (saves the
    full read+write of the array).  Set force_copy=True to stream the data
    through the Pallas identity-copy kernel (fresh physical buffer).
    """
    shape = [int(s) for s in shape]
    prod = int(math.prod(shape)) if shape else 1
    n = x.size
    assert prod > 0 and n % prod == 0, (
        f"cannot reshape {x.shape} to [-1] + {shape}")
    out_shape = (n // prod, *shape)

    if not force_copy or n == 0:
        # Fast path: metadata-only reshape (the common case).
        return jnp.reshape(x, out_shape)

    if n % _LANE != 0:
        # Ragged element count: padding + slicing would add two whole-array
        # HBM passes (~3x traffic), so fall back to the free metadata reshape.
        return jnp.reshape(x, out_shape)

    flat = jnp.reshape(x, (n,))                      # row-major flatten (metadata)
    out_flat = _pallas_flat_copy(flat, lane_width=lane_width, row_tile=row_tile)
    return out_flat.reshape(out_shape)


class Reshape:
    """Mirror of the PyTorch module: forward(x) = x.reshape([-1] + shape)."""

    def __init__(self, shape):
        self.shape = list(shape)

    def __call__(self, x, **kwargs):
        return reshape_forward(x, self.shape, **kwargs)


if __name__ == "__main__":
    key = jax.random.PRNGKey(0)
    k1, k2, k3 = jax.random.split(key, 3)

    # Case 1: NCHW (2, 4, 16, 16) -> (-1, 1024).  Default (metadata) fast path
    # plus the explicit Pallas-copy path; both must match the reference.
    x1 = jax.random.normal(k1, (2, 4, 16, 16), dtype=jnp.float32)
    mod1 = Reshape([4 * 16 * 16])
    out1_fast = jax.block_until_ready(mod1(x1))
    out1_copy = jax.block_until_ready(mod1(x1, force_copy=True))
    ref1 = jnp.reshape(x1, (-1, 1024))
    assert out1_fast.shape == (2, 1024) and out1_copy.shape == (2, 1024)
    assert jnp.array_equal(out1_fast, ref1)
    assert jnp.array_equal(out1_copy, ref1)

    # Case 2: same input -> (-1, 8, 128) through the Pallas copy kernel.
    mod2 = Reshape([8, 128])
    out2 = jax.block_until_ready(mod2(x1, force_copy=True))
    assert out2.shape == (2, 8, 128)
    assert jnp.array_equal(out2, jnp.reshape(x1, (-1, 8, 128)))

    # Case 3: multi-step grid with default auto tiling (exercises pipelining
    # and the "parallel" megacore axis): 65536 elems -> rows=32, tile=8, grid=4.
    x3 = jax.random.normal(k2, (8, 8, 32, 32), dtype=jnp.float32)
    out3 = jax.block_until_ready(
        reshape_forward(x3, [8 * 32 * 32], force_copy=True))
    assert out3.shape == (8, 8192)
    assert jnp.array_equal(out3, jnp.reshape(x3, (-1, 8192)))

    # Case 4: bf16 input with explicit narrow lanes + small row tile
    # (exercises the packed-sublane granule clamp and partial edge blocks).
    x4 = jax.random.normal(k3, (8, 32, 128), dtype=jnp.bfloat16)
    out4 = jax.block_until_ready(
        reshape_forward(x4, [32 * 128], force_copy=True,
                        lane_width=128, row_tile=16))
    assert out4.shape == (8, 4096)
    assert jnp.array_equal(out4, jnp.reshape(x4, (-1, 4096)))

    # Case 5: ragged element count (210, not 128-aligned) -> metadata fallback
    # even when a copy is requested (no pad/slice extra HBM passes).
    x5 = jax.random.normal(k2, (2, 3, 5, 7), dtype=jnp.float32)
    mod5 = Reshape([3, 35])
    out5 = jax.block_until_ready(mod5(x5, force_copy=True))
    assert out5.shape == (2, 3, 35)
    assert jnp.array_equal(out5, jnp.reshape(x5, (-1, 3, 35)))

    print("KERNEL_OK")
</pallas_src>

<mosaic_0001>
module attributes {stable_mosaic.version = 11 : i64} {
  func.func @_copy_kernel(%arg0: i32, %arg1: memref<1x2048xf32, #tpu.memory_space<vmem>>, %arg2: memref<1x2048xf32, #tpu.memory_space<vmem>>) attributes {dimension_semantics = [#tpu.dimension_semantics<parallel>], iteration_bounds = array<i64: 1>, scalar_prefetch = 0 : i64, scratch_operands = 0 : i64, tpu.core_type = #tpu.core_type<tc>, window_params = [{transform_indices = @transform_0, window_bounds = array<i64: 1, 2048>}, {transform_indices = @transform_1, window_bounds = array<i64: 1, 2048>}]} {
    %c0 = arith.constant 0 : index
    %c0_0 = arith.constant 0 : index
    %0 = vector.load %arg1[%c0, %c0_0] : memref<1x2048xf32, #tpu.memory_space<vmem>>, vector<1x2048xf32>
    %c0_1 = arith.constant 0 : index
    %c0_2 = arith.constant 0 : index
    %1 = vector.load %arg2[%c0_1, %c0_2] : memref<1x2048xf32, #tpu.memory_space<vmem>>, vector<1x2048xf32>
    tpu.vector_store %arg2[%c0_1, %c0_2], %0 {strides = array<i32>} : memref<1x2048xf32, #tpu.memory_space<vmem>>, vector<1x2048xf32>,
    return
  }
  func.func @transform_0(%arg0: i32) -> (i32, i32) {
    %c0_i32 = arith.constant 0 : i32
    %c0_i32_0 = arith.constant 0 : i32
    return %arg0, %c0_i32 : i32, i32
  }
  func.func @transform_1(%arg0: i32) -> (i32, i32) {
    %c0_i32 = arith.constant 0 : i32
    %c0_i32_0 = arith.constant 0 : i32
    return %arg0, %c0_i32 : i32, i32
  }
}

</mosaic_0001>

<llo_original>
// kernel: tpu_custom_call.1
$region0: #{tpu_custom_call.1}
  #allocation0 [shape = 'u32[]', space=smem, size = 0x4, offset = 0x4, fixed_abs, tag = 'smem constant byte address 0x4 - core index']
  #allocation1 [shape = 'u32[144,128]{1,0:T(1,128)}', space=vmem, size = 0x12000, scoped, tag = 'internal scratch']
  %s0 = inlined_call_operand.hbm [shape: f32[1,2048], index: 0, kind: input, shape index: {}]
  %s1 = inlined_call_operand.hbm [shape: f32[1,2048], index: 1, kind: output, shape index: {}]
  %s2 = sld [smem:[#allocation0]]
  $region18: #{tpu_custom_call.1} parent=0
    _
  %s4 = ssub.s32 1, %s2
  %s5 = scalar_select 0, %s4, %s2
  $region1: #{tpu_custom_call.1} parent=0
    #allocation2 [shape = 'u8[8192]{0}', space=vmem, size = 0x2000, scoped, tag = 'input window, operand 0, single buffered']
    #allocation3 [shape = 's32[1]{0}', space=sflag, size = 0x4, scoped, tag = 'scoped memory for tpu_custom_call.1']
    #allocation4 [shape = 's32[1]{0}', space=sflag, size = 0x4, scoped, tag = 'scoped memory for tpu_custom_call.1']
    #allocation5 [shape = 'u8[8192]{0}', space=vmem, size = 0x2000, scoped, tag = 'output window, operand 0, single buffered']
    %6 = vsyncpa [#allocation3], 0
    %7 = vsyncpa [#allocation4], 0
    // Predicated region
    $region2: #{tpu_custom_call.1} parent=1 // pred_check
      _
    $region3: #{tpu_custom_call.1} parent=1 // pred_check_branch
      %9 = sbr.rel (0) target = $region5
    $region4: #{tpu_custom_call.1} parent=1 // pred_region
      %s11 = ssub.s32 256, 256
      %12 = vsyncadd [#allocation3], %s11
      %s14 = sshll.u32 [#allocation2], 4
      %s15 = int_to_ptr.vmem [resolvable:$true] %s14
      %17 = dma.hbm_to_vmem [thread:$0]  %s0, 256, %s15, [#allocation3]
    $region5: #{tpu_custom_call.1} parent=1 // pred_fallthru
      _
    // Predicated region
    $region6: #{tpu_custom_call.1} parent=1 // pred_check
      _
    $region7: #{tpu_custom_call.1} parent=1 // pred_check_branch
      %19 = sbr.rel (0) target = $region9
    $region8: #{tpu_custom_call.1} parent=1 // pred_region
      %20 = dma.done [#allocation3], 256
    $region9: #{tpu_custom_call.1} parent=1 // pred_fallthru
      _
    %v21 = vld [vmem:[#allocation2] sm:$0xff]
    %v22 = vld [vmem:[#allocation2 + $0x8] sm:$0xff]
    %23 = vst [vmem:[#allocation5] sm:$0xff] %v21
    %24 = vst [vmem:[#allocation5 + $0x8] sm:$0xff] %v22
    // Predicated region
    $region10: #{tpu_custom_call.1} parent=1 // pred_check
      _
    $region11: #{tpu_custom_call.1} parent=1 // pred_check_branch
      %26 = sbr.rel (0) target = $region13
    $region12: #{tpu_custom_call.1} parent=1 // pred_region
      %s28 = ssub.s32 256, 256
      %29 = vsyncadd [#allocation4], %s28
      %s31 = sshll.u32 [#allocation5], 4
      %s32 = int_to_ptr.vmem [resolvable:$true] %s31
      %34 = dma.vmem_to_hbm [thread:$0]  %s32, 256, %s1, [#allocation4]
    $region13: #{tpu_custom_call.1} parent=1 // pred_fallthru
      _
    // Predicated region
    $region14: #{tpu_custom_call.1} parent=1 // pred_check
      _
    $region15: #{tpu_custom_call.1} parent=1 // pred_check_branch
      %36 = sbr.rel (0) target = $region17
    $region16: #{tpu_custom_call.1} parent=1 // pred_region
      %37 = dma.done [#allocation4], 256
    $region17: #{tpu_custom_call.1} parent=1 // pred_fallthru
      _
    %38 = vsyncpa [#allocation3], 1
    %39 = vsyncpa [#allocation4], 1

</llo_original>
